<compile_context>
chip_gen: v7x
topology: tpu7x:2x2x1
jax: 0.10.0
libtpu: 0.0.40
codegen_flags: <defaults>
</compile_context>

<pallas_src>
from functools import partial

import jax
import jax.numpy as jnp
from jax.experimental import pallas as pl
from jax.experimental.pallas import tpu as pltpu

EPS = 1e-5


def _round_up(x, m):
    return ((x + m - 1) // m) * m


def prenorm_kernel(x_ref, gamma_ref, beta_ref, w_ref, b_ref, o_ref, *, mxu_dtype):
    # x_ref:      (TM, D)   rows to normalize (full feature width)
    # gamma/beta: (1, D)    LayerNorm affine params (f32)
    # w_ref:      (D, TN)   column tile of fn's Linear weight (applied as y @ W)
    # b_ref:      (1, TN)   column tile of fn's Linear bias (f32)
    # o_ref:      (TM, TN)  output tile
    x = x_ref[...].astype(jnp.float32)

    # LayerNorm over the last dim (biased variance, matches torch.nn.LayerNorm);
    # statistics stay in f32.
    mean = jnp.mean(x, axis=-1, keepdims=True)
    centered = x - mean
    var = jnp.mean(centered * centered, axis=-1, keepdims=True)
    xn = centered * jax.lax.rsqrt(var + EPS)
    y = xn * gamma_ref[...] + beta_ref[...]

    # fn(normed) = normed @ W + b.  Feed the MXU low-precision operands
    # (bf16 by default) while accumulating in f32.
    out = jnp.dot(y.astype(mxu_dtype), w_ref[...],
                  preferred_element_type=jnp.float32)
    out = out + b_ref[...]
    o_ref[...] = out.astype(o_ref.dtype)


def prenorm(x, gamma, beta, w, b, *, tm=256, tn=None,
            mxu_dtype=jnp.bfloat16, vmem_limit_bytes=64 * 1024 * 1024):
    """PreNorm forward: fn(LayerNorm(x)) with fn = Linear(D, D).

    x: (B, S, D) -> (B, S, D).

    tm: row tile. Sweep 256/512/1024 (128/256 on v5e); rounded to a multiple
        of 8 and clamped/tail-padded so any B*S works.
    tn: output-column tile for W. Bounds W's VMEM footprint to D*tn per buffer
        and provides the second (parallel) grid axis. None = auto.
    """
    B, S, D = x.shape
    rows = B * S

    # --- column tile: bounds W's VMEM footprint, gives TCs column parallelism ---
    if tn is None:
        for cand in (512, 256, 128):
            if D % cand == 0:
                tn = cand
                break
        else:
            tn = D
    if D % tn != 0:
        tn = D
    n_col = D // tn

    # --- row tile + tail handling (pad rows up to a multiple of tm) ---
    tm = max(8, _round_up(tm, 8))
    tm = min(tm, _round_up(rows, 8))          # don't over-pad tiny inputs
    rows_p = pl.cdiv(rows, tm) * tm
    n_row = rows_p // tm

    x2 = x.reshape(rows, D)
    if rows_p != rows:
        x2 = jnp.pad(x2, ((0, rows_p - rows), (0, 0)))

    gamma2 = gamma.reshape(1, D).astype(jnp.float32)
    beta2 = beta.reshape(1, D).astype(jnp.float32)
    w2 = w.astype(mxu_dtype)                  # halve W HBM traffic + bf16 MXU feed
    b2 = b.reshape(1, D).astype(jnp.float32)

    out2 = pl.pallas_call(
        partial(prenorm_kernel, mxu_dtype=mxu_dtype),
        out_shape=jax.ShapeDtypeStruct((rows_p, D), x.dtype),
        grid_spec=pltpu.PrefetchScalarGridSpec(
            num_scalar_prefetch=0,
            # columns innermost: the x row tile's block index is constant in j,
            # so it is not re-fetched while the W column tiles stream through.
            grid=(n_row, n_col),
            in_specs=[
                pl.BlockSpec((tm, D), lambda i, j: (i, 0)),   # x rows (full width)
                pl.BlockSpec((1, D), lambda i, j: (0, 0)),    # gamma
                pl.BlockSpec((1, D), lambda i, j: (0, 0)),    # beta
                pl.BlockSpec((D, tn), lambda i, j: (0, j)),   # W column tile
                pl.BlockSpec((1, tn), lambda i, j: (0, j)),   # bias column tile
            ],
            out_specs=pl.BlockSpec((tm, tn), lambda i, j: (i, j)),
        ),
        compiler_params=pltpu.CompilerParams(
            dimension_semantics=("parallel", "parallel"),
            vmem_limit_bytes=vmem_limit_bytes,
        ),
    )(x2, gamma2, beta2, w2, b2)

    if rows_p != rows:
        out2 = out2[:rows]
    return out2.reshape(B, S, D)


def prenorm_ref(x, gamma, beta, w, b, mxu_dtype=jnp.float32):
    xf = x.astype(jnp.float32)
    mean = jnp.mean(xf, axis=-1, keepdims=True)
    var = jnp.mean((xf - mean) ** 2, axis=-1, keepdims=True)
    xn = (xf - mean) * jax.lax.rsqrt(var + EPS)
    y = xn * gamma.astype(jnp.float32) + beta.astype(jnp.float32)
    out = jnp.dot(y.astype(mxu_dtype), w.astype(mxu_dtype),
                  preferred_element_type=jnp.float32) + b.astype(jnp.float32)
    return out.astype(x.dtype)


if __name__ == "__main__":
    B, S, D = 2, 8, 32
    key = jax.random.PRNGKey(0)
    kx, kg, kb, kw, kbi = jax.random.split(key, 5)

    x = jax.random.normal(kx, (B, S, D), dtype=jnp.float32)
    # LayerNorm params (torch default init is gamma=1, beta=0; perturb
    # deterministically so the affine path is actually exercised).
    gamma = 1.0 + 0.1 * jax.random.normal(kg, (D,), dtype=jnp.float32)
    beta = 0.1 * jax.random.normal(kb, (D,), dtype=jnp.float32)
    # fn = Linear(D, D) params.
    w = jax.random.normal(kw, (D, D), dtype=jnp.float32) / jnp.sqrt(D)
    b = 0.1 * jax.random.normal(kbi, (D,), dtype=jnp.float32)

    out = prenorm(x, gamma, beta, w, b)           # default: bf16 MXU operands
    out = jax.block_until_ready(out)
    assert out.shape == (B, S, D)

    # Same-precision reference (bf16 matmul operands, f32 accumulation).
    ref_bf16 = prenorm_ref(x, gamma, beta, w, b, mxu_dtype=jnp.bfloat16)
    assert jnp.allclose(out, ref_bf16, atol=2e-3, rtol=2e-3), "mismatch vs bf16 reference"

    # Pure-f32 reference (module semantics) at a tolerance covering the bf16 cast.
    ref_f32 = prenorm_ref(x, gamma, beta, w, b, mxu_dtype=jnp.float32)
    assert jnp.allclose(out, ref_f32, atol=5e-2, rtol=5e-2), "mismatch vs f32 reference"

    # The f32-MXU path stays faithful to the module's numerics.
    out_f32 = jax.block_until_ready(
        prenorm(x, gamma, beta, w, b, mxu_dtype=jnp.float32))
    assert jnp.allclose(out_f32, ref_f32, atol=1e-4, rtol=1e-4), "mismatch (f32 path)"

    print("KERNEL_OK")
</pallas_src>

<mosaic_0001>
module attributes {stable_mosaic.version = 11 : i64} {
  func.func @prenorm_kernel(%arg0: i32, %arg1: i32, %arg2: memref<16x32xf32, #tpu.memory_space<vmem>>, %arg3: memref<1x32xf32, #tpu.memory_space<vmem>>, %arg4: memref<1x32xf32, #tpu.memory_space<vmem>>, %arg5: memref<32x32xbf16, #tpu.memory_space<vmem>>, %arg6: memref<1x32xf32, #tpu.memory_space<vmem>>, %arg7: memref<16x32xf32, #tpu.memory_space<vmem>>) attributes {dimension_semantics = [#tpu.dimension_semantics<parallel>, #tpu.dimension_semantics<parallel>], iteration_bounds = array<i64: 1, 1>, scalar_prefetch = 0 : i64, scratch_operands = 0 : i64, tpu.core_type = #tpu.core_type<tc>, window_params = [{transform_indices = @transform_0, window_bounds = array<i64: 16, 32>}, {pipeline_mode = #tpu.pipeline_mode<synchronous>, transform_indices = @transform_1, window_bounds = array<i64: 1, 32>}, {pipeline_mode = #tpu.pipeline_mode<synchronous>, transform_indices = @transform_2, window_bounds = array<i64: 1, 32>}, {transform_indices = @transform_3, window_bounds = array<i64: 32, 32>}, {transform_indices = @transform_4, window_bounds = array<i64: 1, 32>}, {transform_indices = @transform_5, window_bounds = array<i64: 16, 32>}]} {
    %c0 = arith.constant 0 : index
    %c0_0 = arith.constant 0 : index
    %0 = vector.load %arg2[%c0, %c0_0] : memref<16x32xf32, #tpu.memory_space<vmem>>, vector<16x32xf32>
    %cst = arith.constant dense<0.000000e+00> : vector<16xf32>
    %1 = vector.multi_reduction <add>, %0, %cst [1] : vector<16x32xf32> to vector<16xf32>
    %2 = vector.shape_cast %1 : vector<16xf32> to vector<16x1xf32>
    %cst_1 = arith.constant 3.200000e+01 : f32
    %3 = vector.broadcast %cst_1 : f32 to vector<16x1xf32>
    %4 = arith.divf %2, %3 : vector<16x1xf32>
    %5 = vector.broadcast %4 : vector<16x1xf32> to vector<16x32xf32>
    %6 = arith.subf %0, %5 : vector<16x32xf32>
    %7 = arith.mulf %6, %6 : vector<16x32xf32>
    %cst_2 = arith.constant dense<0.000000e+00> : vector<16xf32>
    %8 = vector.multi_reduction <add>, %7, %cst_2 [1] : vector<16x32xf32> to vector<16xf32>
    %9 = vector.shape_cast %8 : vector<16xf32> to vector<16x1xf32>
    %cst_3 = arith.constant 3.200000e+01 : f32
    %10 = vector.broadcast %cst_3 : f32 to vector<16x1xf32>
    %11 = arith.divf %9, %10 : vector<16x1xf32>
    %cst_4 = arith.constant 9.99999974E-6 : f32
    %12 = vector.broadcast %cst_4 : f32 to vector<16x1xf32>
    %13 = arith.addf %11, %12 : vector<16x1xf32>
    %14 = math.rsqrt %13 : vector<16x1xf32>
    %15 = vector.broadcast %14 : vector<16x1xf32> to vector<16x32xf32>
    %16 = arith.mulf %6, %15 : vector<16x32xf32>
    %c0_5 = arith.constant 0 : index
    %c0_6 = arith.constant 0 : index
    %17 = vector.load %arg3[%c0_5, %c0_6] : memref<1x32xf32, #tpu.memory_space<vmem>>, vector<1x32xf32>
    %18 = vector.broadcast %17 : vector<1x32xf32> to vector<16x32xf32>
    %19 = arith.mulf %16, %18 : vector<16x32xf32>
    %c0_7 = arith.constant 0 : index
    %c0_8 = arith.constant 0 : index
    %20 = vector.load %arg4[%c0_7, %c0_8] : memref<1x32xf32, #tpu.memory_space<vmem>>, vector<1x32xf32>
    %21 = vector.broadcast %20 : vector<1x32xf32> to vector<16x32xf32>
    %22 = arith.addf %19, %21 : vector<16x32xf32>
    %23 = arith.truncf %22 : vector<16x32xf32> to vector<16x32xbf16>
    %c0_9 = arith.constant 0 : index
    %c0_10 = arith.constant 0 : index
    %24 = vector.load %arg5[%c0_9, %c0_10] : memref<32x32xbf16, #tpu.memory_space<vmem>>, vector<32x32xbf16>
    %cst_11 = arith.constant dense<0.000000e+00> : vector<16x32xf32>
    %25 = tpu.matmul %23, %24, %cst_11 {dimension_numbers = #tpu.dot_dimension_numbers<[1], [0], [0], [1], [0, 0, 1, 1], [], []>} : vector<16x32xbf16>, vector<32x32xbf16>, vector<16x32xf32> -> vector<16x32xf32>
    %c0_12 = arith.constant 0 : index
    %c0_13 = arith.constant 0 : index
    %26 = vector.load %arg6[%c0_12, %c0_13] : memref<1x32xf32, #tpu.memory_space<vmem>>, vector<1x32xf32>
    %27 = vector.broadcast %26 : vector<1x32xf32> to vector<16x32xf32>
    %28 = arith.addf %25, %27 : vector<16x32xf32>
    %c0_14 = arith.constant 0 : index
    %c0_15 = arith.constant 0 : index
    %29 = vector.load %arg7[%c0_14, %c0_15] : memref<16x32xf32, #tpu.memory_space<vmem>>, vector<16x32xf32>
    tpu.vector_store %arg7[%c0_14, %c0_15], %28 {strides = array<i32>} : memref<16x32xf32, #tpu.memory_space<vmem>>, vector<16x32xf32>,
    return
  }
  func.func @transform_0(%arg0: i32, %arg1: i32) -> (i32, i32) {
    %c0_i32 = arith.constant 0 : i32
    %c0_i32_0 = arith.constant 0 : i32
    return %arg0, %c0_i32 : i32, i32
  }
  func.func @transform_1(%arg0: i32, %arg1: i32) -> (i32, i32) {
    %c0_i32 = arith.constant 0 : i32
    %c0_i32_0 = arith.constant 0 : i32
    %c0_i32_1 = arith.constant 0 : i32
    return %c0_i32, %c0_i32_0 : i32, i32
  }
  func.func @transform_2(%arg0: i32, %arg1: i32) -> (i32, i32) {
    %c0_i32 = arith.constant 0 : i32
    %c0_i32_0 = arith.constant 0 : i32
    %c0_i32_1 = arith.constant 0 : i32
    return %c0_i32, %c0_i32_0 : i32, i32
  }
  func.func @transform_3(%arg0: i32, %arg1: i32) -> (i32, i32) {
    %c0_i32 = arith.constant 0 : i32
    %c0_i32_0 = arith.constant 0 : i32
    return %c0_i32, %arg1 : i32, i32
  }
  func.func @transform_4(%arg0: i32, %arg1: i32) -> (i32, i32) {
    %c0_i32 = arith.constant 0 : i32
    %c0_i32_0 = arith.constant 0 : i32
    return %c0_i32, %arg1 : i32, i32
  }
  func.func @transform_5(%arg0: i32, %arg1: i32) -> (i32, i32) {
    %c0_i32 = arith.constant 0 : i32
    return %arg0, %arg1 : i32, i32
  }
}

</mosaic_0001>

<llo_original>
// kernel: tpu_custom_call.1
$region0: #{tpu_custom_call.1}
  #allocation0 [shape = 'u32[]', space=smem, size = 0x4, offset = 0x4, fixed_abs, tag = 'smem constant byte address 0x4 - core index']
  #allocation1 [shape = 'u32[144,128]{1,0:T(1,128)}', space=vmem, size = 0x12000, scoped, tag = 'internal scratch']
  %s0 = inlined_call_operand.hbm [shape: f32[16,32], index: 0, kind: input, shape index: {}]
  %s1 = inlined_call_operand.hbm [shape: f32[1,32], index: 1, kind: input, shape index: {}]
  %s2 = inlined_call_operand.hbm [shape: f32[1,32], index: 2, kind: input, shape index: {}]
  %s3 = inlined_call_operand.hbm [shape: bf16[32,32], index: 3, kind: input, shape index: {}]
  %s4 = inlined_call_operand.hbm [shape: f32[1,32], index: 4, kind: input, shape index: {}]
  %s5 = inlined_call_operand.hbm [shape: f32[16,32], index: 5, kind: output, shape index: {}]
  %s6 = sld [smem:[#allocation0]]
  $region50: #{tpu_custom_call.1} parent=0
    _
  %s8 = ssub.s32 1, %s6
  %s9 = scalar_select 0, %s8, %s6
  $region1: #{tpu_custom_call.1} parent=0
    #allocation2 [shape = 'u8[8192]{0}', space=vmem, size = 0x2000, scoped, tag = 'input window, operand 0, single buffered']
    #allocation3 [shape = 's32[1]{0}', space=sflag, size = 0x4, scoped, tag = 'scoped memory for tpu_custom_call.1']
    #allocation4 [shape = 's32[1]{0}', space=sflag, size = 0x4, scoped, tag = 'scoped memory for tpu_custom_call.1']
    #allocation5 [shape = 'u8[512]{0}', space=vmem, size = 0x400, scoped, tag = 'input window, operand 1, single buffered']
    #allocation6 [shape = 's32[1]{0}', space=sflag, size = 0x4, scoped, tag = 'scoped memory for tpu_custom_call.1']
    #allocation7 [shape = 'u8[512]{0}', space=vmem, size = 0x400, scoped, tag = 'input window, operand 2, single buffered']
    #allocation8 [shape = 'u8[8192]{0}', space=vmem, size = 0x2000, scoped, tag = 'input window, operand 3, single buffered']
    #allocation9 [shape = 's32[1]{0}', space=sflag, size = 0x4, scoped, tag = 'scoped memory for tpu_custom_call.1']
    #allocation10 [shape = 'u8[512]{0}', space=vmem, size = 0x400, scoped, tag = 'input window, operand 4, single buffered']
    #allocation11 [shape = 'u8[8192]{0}', space=vmem, size = 0x2000, scoped, tag = 'output window, operand 0, single buffered']
    %10 = vsyncpa [#allocation3], 0
    %11 = vsyncpa [#allocation6], 0
    %12 = vsyncpa [#allocation9], 0
    %13 = vsyncpa [#allocation4], 0
    // Predicated region
    $region2: #{tpu_custom_call.1} parent=1 // pred_check
      _
    $region3: #{tpu_custom_call.1} parent=1 // pred_check_branch
      %15 = sbr.rel (0) target = $region5
    $region4: #{tpu_custom_call.1} parent=1 // pred_region
      %s17 = ssub.s32 256, 256
      %18 = vsyncadd [#allocation3], %s17
      %s19 = sshll.u32 [#allocation2], 4
      %s20 = int_to_ptr.vmem [resolvable:$true] %s19
      %25 = dma.hbm_to_vmem [thread:$0]  %s0, 256, %s20, [#allocation3], 128, 128, 8
    $region5: #{tpu_custom_call.1} parent=1 // pred_fallthru
      _
    // Predicated region
    $region6: #{tpu_custom_call.1} parent=1 // pred_check
      _
    $region7: #{tpu_custom_call.1} parent=1 // pred_check_branch
      %27 = sbr.rel (0) target = $region9
    $region8: #{tpu_custom_call.1} parent=1 // pred_region
      %s29 = ssub.s32 16, 16
      %30 = vsyncadd [#allocation6], %s29
      %s32 = sshll.u32 [#allocation5], 4
      %s33 = int_to_ptr.vmem [resolvable:$true] %s32
      %35 = dma.hbm_to_vmem [thread:$0]  %s1, 16, %s33, [#allocation6]
    $region9: #{tpu_custom_call.1} parent=1 // pred_fallthru
      _
    // Predicated region
    $region10: #{tpu_custom_call.1} parent=1 // pred_check
      _
    $region11: #{tpu_custom_call.1} parent=1 // pred_check_branch
      %37 = sbr.rel (0) target = $region13
    $region12: #{tpu_custom_call.1} parent=1 // pred_region
      %s39 = ssub.s32 16, 16
      %40 = vsyncadd [#allocation6], %s39
      %s42 = sshll.u32 [#allocation7], 4
      %s43 = int_to_ptr.vmem [resolvable:$true] %s42
      %45 = dma.hbm_to_vmem [thread:$0]  %s2, 16, %s43, [#allocation6]
    $region13: #{tpu_custom_call.1} parent=1 // pred_fallthru
      _
    // Predicated region
    $region14: #{tpu_custom_call.1} parent=1 // pred_check
      _
    $region15: #{tpu_custom_call.1} parent=1 // pred_check_branch
      %47 = sbr.rel (0) target = $region17
    $region16: #{tpu_custom_call.1} parent=1 // pred_region
      %s49 = ssub.s32 256, 256
      %50 = vsyncadd [#allocation9], %s49
      %s51 = sshll.u32 [#allocation8], 4
      %s52 = int_to_ptr.vmem [resolvable:$true] %s51
      %57 = dma.hbm_to_vmem [thread:$0]  %s3, 256, %s52, [#allocation9], 64, 64, 4
    $region17: #{tpu_custom_call.1} parent=1 // pred_fallthru
      _
    // Predicated region
    $region18: #{tpu_custom_call.1} parent=1 // pred_check
      _
    $region19: #{tpu_custom_call.1} parent=1 // pred_check_branch
      %59 = sbr.rel (0) target = $region21
    $region20: #{tpu_custom_call.1} parent=1 // pred_region
      %s61 = ssub.s32 16, 16
      %62 = vsyncadd [#allocation9], %s61
      %s64 = sshll.u32 [#allocation10], 4
      %s65 = int_to_ptr.vmem [resolvable:$true] %s64
      %67 = dma.hbm_to_vmem [thread:$0]  %s4, 16, %s65, [#allocation9]
    $region21: #{tpu_custom_call.1} parent=1 // pred_fallthru
      _
    // Predicated region
    $region22: #{tpu_custom_call.1} parent=1 // pred_check
      _
    $region23: #{tpu_custom_call.1} parent=1 // pred_check_branch
      %69 = sbr.rel (0) target = $region25
    $region24: #{tpu_custom_call.1} parent=1 // pred_region
      %70 = dma.done [#allocation3], 256
    $region25: #{tpu_custom_call.1} parent=1 // pred_fallthru
      _
    // Predicated region
    $region26: #{tpu_custom_call.1} parent=1 // pred_check
      _
    $region27: #{tpu_custom_call.1} parent=1 // pred_check_branch
      %72 = sbr.rel (0) target = $region29
    $region28: #{tpu_custom_call.1} parent=1 // pred_region
      %73 = dma.done [#allocation6], 16
    $region29: #{tpu_custom_call.1} parent=1 // pred_fallthru
      _
    // Predicated region
    $region30: #{tpu_custom_call.1} parent=1 // pred_check
      _
    $region31: #{tpu_custom_call.1} parent=1 // pred_check_branch
      %75 = sbr.rel (0) target = $region33
    $region32: #{tpu_custom_call.1} parent=1 // pred_region
      %76 = dma.done [#allocation6], 16
    $region33: #{tpu_custom_call.1} parent=1 // pred_fallthru
      _
    // Predicated region
    $region34: #{tpu_custom_call.1} parent=1 // pred_check
      _
    $region35: #{tpu_custom_call.1} parent=1 // pred_check_branch
      %78 = sbr.rel (0) target = $region37
    $region36: #{tpu_custom_call.1} parent=1 // pred_region
      %79 = dma.done [#allocation9], 256
    $region37: #{tpu_custom_call.1} parent=1 // pred_fallthru
      _
    // Predicated region
    $region38: #{tpu_custom_call.1} parent=1 // pred_check
      _
    $region39: #{tpu_custom_call.1} parent=1 // pred_check_branch
      %81 = sbr.rel (0) target = $region41
    $region40: #{tpu_custom_call.1} parent=1 // pred_region
      %82 = dma.done [#allocation9], 16
    $region41: #{tpu_custom_call.1} parent=1 // pred_fallthru
      _
    %v84 = vld [vmem:[#allocation2] sm:$0xff]
    %v85 = vld [vmem:[#allocation2 + $0x8] sm:$0xff]
    %vm86 = vcmask 261120
    %v87 = vsel %vm86, %v84, 0.0
    %88 = vadd.xlane.f32.xlu0 %v87
    %v89 = vpop.xlane.xlu0 %88
    %v90 = vsel %vm86, %v85, 0.0
    %91 = vadd.xlane.f32.xlu0 %v90
    %v92 = vpop.xlane.xlu0 %91
    %v93 = vrcp.pop 32.0
    %v94 = vmul.f32 %v89, %v93
    %v95 = vmul.f32 %v92, %v93
    %v96 = vsub.f32 %v84, %v94
    %v97 = vsub.f32 %v85, %v95
    %v98 = vmul.f32 %v96, %v96
    %v99 = vmul.f32 %v97, %v97
    %v100 = vsel %vm86, %v98, 0.0
    %101 = vadd.xlane.f32.xlu0 %v100
    %v102 = vpop.xlane.xlu0 %101
    %v103 = vsel %vm86, %v99, 0.0
    %104 = vadd.xlane.f32.xlu0 %v103
    %v105 = vpop.xlane.xlu0 %104
    %v106 = vmul.f32 %v102, %v93
    %v107 = vmul.f32 %v105, %v93
    %v108 = vadd.f32 %v106, 1e-05
    %v109 = vadd.f32 %v107, 1e-05
    %v110 = vrsqrt.pop %v108
    %v111 = vrsqrt.pop %v109
    %v112 = vmul.f32 %v96, %v110
    %v113 = vmul.f32 %v97, %v111
    %v114 = vld [vmem:[#allocation5] sm:$0x1]
    %v116 = vlaneseq
    %v117 = vshrl.u32 %v116, 7
    %v118 = vsub.s32 0, %v117
    %v119 = vrot.slane %v114, %v118
    %v121 = vmul.f32 %v112, %v119
    %v122 = vmul.f32 %v113, %v119
    %v123 = vld [vmem:[#allocation7] sm:$0x1]
    %v125 = vlaneseq
    %v126 = vshrl.u32 %v125, 7
    %v127 = vsub.s32 0, %v126
    %v128 = vrot.slane %v123, %v127
    %v130 = vadd.f32 %v121, %v128
    %v131 = vadd.f32 %v122, %v128
    %v132 = vpack.c.bf16 %v131, %v130
    %v133 = vld [vmem:[#allocation8] sm:$0xf]
    %v134 = vld [vmem:[#allocation8 + $0x4] sm:$0xf]
    %v135 = vld [vmem:[#allocation8 + $0x8] sm:$0xf]
    %v136 = vld [vmem:[#allocation8 + $0xc] sm:$0xf]
    %v137 = vld [vmem:[#allocation10] sm:$0x1]
    %v139 = vlaneseq
    %v140 = vshrl.u32 %v139, 7
    %v141 = vsub.s32 0, %v140
    %v142 = vrot.slane %v137, %v141
    %v148 = vunpack.c.l.b16 %v133
    %v149 = vunpack.c.l.b16 %v134
    %v150 = vunpack.c.l.b16 %v135
    %v151 = vunpack.c.l.b16 %v136
    %v152 = vpack.c.b16 %v149, %v148
    %v153 = vpack.c.b16 %v151, %v150
    %v157 = vsel %vm86, %v132, 0
    %159 = vmatprep.subr.bf16.mxu0 0
    %160 = vmatpush1.bf16.msra.mxu0 %v152
    %161 = vmatprep.subr.bf16.mxu0 0
    %162 = vmatpush1.bf16.msra.mxu0 %v153
    %163 = vmatprep.subr.bf16.mxu0 0
    %164 = vmatpush1.bf16.msra.mxu0 0
    %165 = vmatprep.subr.bf16.mxu0 0
    %166 = vmatpush1.bf16.msra.mxu0 0
    %167 = vmatprep.subr.bf16.mxu0 0
    %168 = vmatpush1.bf16.msra.mxu0 0
    %169 = vmatprep.subr.bf16.mxu0 0
    %170 = vmatpush1.bf16.msra.mxu0 0
    %171 = vmatprep.subr.bf16.mxu0 0
    %172 = vmatpush1.bf16.msra.mxu0 0
    %173 = vmatprep.subr.bf16.mxu0 0
    %174 = vmatpush1.bf16.msra.mxu0 0
    %175 = vmatprep.subr.bf16.mxu0 0
    %176 = vmatpush1.bf16.msra.mxu0 0
    %177 = vmatprep.subr.bf16.mxu0 0
    %178 = vmatpush1.bf16.msra.mxu0 0
    %179 = vmatprep.subr.bf16.mxu0 0
    %180 = vmatpush1.bf16.msra.mxu0 0
    %181 = vmatprep.subr.bf16.mxu0 0
    %182 = vmatpush1.bf16.msra.mxu0 0
    %183 = vmatprep.subr.bf16.mxu0 0
    %184 = vmatpush1.bf16.msra.mxu0 0
    %185 = vmatprep.subr.bf16.mxu0 0
    %186 = vmatpush1.bf16.msra.mxu0 0
    %187 = vmatprep.subr.bf16.mxu0 0
    %188 = vmatpush1.bf16.msra.mxu0 0
    %189 = vmatprep.subr.bf16.mxu0 0
    %190 = vmatpush1.bf16.msra.mxu0 0
    %191 = vmatprep.mubr.bf16.mxu0 0
    %192 = vmatmul.mubr.bf16.gmra.mrb[0].mxu0 %v157
    %v193 = vpop.f32.mrb[0].mxu0
    %v194 = vadd.f32 %v142, %v193
    %v195 = vpop.f32.mrb[0].mxu0
    %v196 = vpop.f32.mrb[0].mxu0
    %v197 = vadd.f32 %v142, %v196
    %v198 = vpop.f32.mrb[0].mxu0
    %199 = vdwg.mxu0
    %200 = vst.msk [vmem:[#allocation11] sm:$0xff] %vm86, %v194
    %201 = vst.msk [vmem:[#allocation11 + $0x8] sm:$0xff] %vm86, %v197
    // Predicated region
    $region42: #{tpu_custom_call.1} parent=1 // pred_check
      _
    $region43: #{tpu_custom_call.1} parent=1 // pred_check_branch
      %203 = sbr.rel (0) target = $region45
    $region44: #{tpu_custom_call.1} parent=1 // pred_region
      %s205 = ssub.s32 256, 256
      %206 = vsyncadd [#allocation4], %s205
      %s207 = sshll.u32 [#allocation11], 4
      %s208 = int_to_ptr.vmem [resolvable:$true] %s207
      %213 = dma.vmem_to_hbm [thread:$0]  %s208, 256, %s5, [#allocation4], 128, 128, 8
    $region45: #{tpu_custom_call.1} parent=1 // pred_fallthru
      _
    // Predicated region
    $region46: #{tpu_custom_call.1} parent=1 // pred_check
      _
    $region47: #{tpu_custom_call.1} parent=1 // pred_check_branch
      %215 = sbr.rel (0) target = $region49
    $region48: #{tpu_custom_call.1} parent=1 // pred_region
      %216 = dma.done [#allocation4], 256
    $region49: #{tpu_custom_call.1} parent=1 // pred_fallthru
      _
    %217 = vsyncpa [#allocation3], 1
    %218 = vsyncpa [#allocation6], 1
    %219 = vsyncpa [#allocation9], 1
    %220 = vsyncpa [#allocation4], 1

</llo_original>
